<compile_context>
chip_gen: v5e
topology: v5e:2x2
jax: 0.10.0
libtpu: 0.0.40
codegen_flags: <defaults>
</compile_context>

<pallas_src>
import jax
import jax.numpy as jnp
from jax.experimental import pallas as pl
from jax.experimental.pallas import tpu as pltpu


def image_proj_kernel(x_ref, w_ref, b_ref, g_ref, beta_ref, o_ref):
    # x_ref:    (B, E)        input dtype (tiny; pinned across the grid)
    # w_ref:    (E, tps*D)    bf16 weight columns for this step's tokens
    # b_ref:    (1, tps*D)    f32 bias columns for this step's tokens
    # g_ref:    (1, D)        f32 LayerNorm gamma (pinned)
    # beta_ref: (1, D)        f32 LayerNorm beta  (pinned)
    # o_ref:    (B, tps*D)    output tile for this step's tokens
    D = g_ref.shape[-1]
    tps = o_ref.shape[-1] // D

    # bf16 x bf16 -> f32 accumulation on the MXU. x is cast in-kernel (it is
    # tiny), so the wrapper never emits a separate cast HLO.
    x = x_ref[...].astype(jnp.bfloat16)
    y = jnp.dot(x, w_ref[...], preferred_element_type=jnp.float32)
    y = y + b_ref[...]                                   # (B, tps*D) f32

    g = g_ref[...]
    be = beta_ref[...]

    # LayerNorm per token on static, 128-aligned lane slices (no relayout).
    # tps is a trace-time constant, so this loop fully unrolls.
    for j in range(tps):
        yj = y[:, j * D:(j + 1) * D]                     # (B, D)
        mean = jnp.mean(yj, axis=-1, keepdims=True)
        c = yj - mean
        var = jnp.mean(c * c, axis=-1, keepdims=True)    # torch eps = 1e-5
        o_ref[:, j * D:(j + 1) * D] = (
            c * jax.lax.rsqrt(var + 1e-5) * g + be
        ).astype(o_ref.dtype)


def prepare_image_proj_params(w, b, gamma, beta):
    """One-time (load-time) parameter preparation — NOT part of the hot path.

    w: (E, T*D) projection weight, i.e. the transpose of the PyTorch
       nn.Linear weight (which is stored (T*D, E)). Cast to bf16 here, once,
       so each forward call streams bf16 W straight from HBM with no per-call
       cast op.
    """
    return {
        "w": w.astype(jnp.bfloat16),
        "b": b.reshape(1, -1).astype(jnp.float32),
        "gamma": gamma.reshape(1, -1).astype(jnp.float32),
        "beta": beta.reshape(1, -1).astype(jnp.float32),
    }


def _auto_tokens_per_step(E, D, T):
    # Fold tokens per grid step only while the bf16 weight slab would be
    # smaller than ~1 MiB (i.e. its DMA would not clearly dominate the
    # ~0.35 us fixed per-step overhead, relevant at v7x's 3.2 TB/s).
    # At realistic IP-Adapter sizes (E=D=1024 -> 2 MiB slab) this returns 1,
    # matching the per-token granularity recommended for v6e/v5e.
    slab_bytes = E * D * 2
    tps = 1
    while tps < T and T % (2 * tps) == 0 and slab_bytes * tps < (1 << 20):
        tps *= 2
    return tps


def image_proj_model(image_embeds, params, *, num_tokens, cross_dim,
                     out_dtype=jnp.bfloat16, tokens_per_step=None):
    """image_embeds: (B, E); params from prepare_image_proj_params."""
    B, E = image_embeds.shape
    T, D = num_tokens, cross_dim
    w, b, gamma, beta = params["w"], params["b"], params["gamma"], params["beta"]
    assert w.shape == (E, T * D) and w.dtype == jnp.bfloat16
    assert b.shape == (1, T * D) and gamma.shape == (1, D) and beta.shape == (1, D)
    assert D % 128 == 0, "cross_attention_dim must be lane-aligned (multiple of 128)"
    assert E % 16 == 0, "clip_embeddings_dim must be bf16 sublane-aligned (multiple of 16)"

    tps = tokens_per_step if tokens_per_step is not None else _auto_tokens_per_step(E, D, T)
    assert T % tps == 0, "tokens_per_step must divide clip_extra_context_tokens"
    n_steps = T // tps
    bd = tps * D

    out_itemsize = jnp.dtype(out_dtype).itemsize
    cost = pl.CostEstimate(
        flops=2 * B * E * T * D + 8 * B * T * D,
        transcendentals=B * T,  # one rsqrt per (batch, token)
        bytes_accessed=(B * E * image_embeds.dtype.itemsize     # x
                        + E * T * D * 2                         # bf16 W (dominant)
                        + T * D * 4 + 2 * D * 4                 # bias, gamma, beta
                        + B * T * D * out_itemsize),            # output
    )

    out_2d = pl.pallas_call(
        image_proj_kernel,
        out_shape=jax.ShapeDtypeStruct((B, T * D), out_dtype),
        grid_spec=pltpu.PrefetchScalarGridSpec(
            num_scalar_prefetch=0,
            grid=(n_steps,),  # one double-buffered (E, tps*D) weight slab per step
            in_specs=[
                pl.BlockSpec((B, E), lambda t: (0, 0)),    # x (pinned across grid)
                pl.BlockSpec((E, bd), lambda t: (0, t)),   # W[:, t*bd:(t+1)*bd]
                pl.BlockSpec((1, bd), lambda t: (0, t)),   # bias columns
                pl.BlockSpec((1, D), lambda t: (0, 0)),    # gamma (pinned)
                pl.BlockSpec((1, D), lambda t: (0, 0)),    # beta (pinned)
            ],
            out_specs=pl.BlockSpec((B, bd), lambda t: (0, t)),  # lane-dense stores
        ),
        compiler_params=pltpu.CompilerParams(
            # Token slabs are independent -> shard across TCs on v7x;
            # harmless on single-core v5e / v6e.
            dimension_semantics=("parallel",),
        ),
        cost_estimate=cost,
    )(image_embeds, w, b, gamma, beta)

    # (B, T*D) -> (B, T, D): free contiguous reshape, identical to the
    # PyTorch .reshape(-1, T, D). No transpose, no extra HBM round-trip.
    return out_2d.reshape(B, T, D)


def _reference(image_embeds, w, b, gamma, beta, T, D):
    # Mirror the kernel's bf16 weight/activation quantization so the check is
    # tight; the remaining difference is only accumulation-order rounding
    # (plus output-dtype rounding when out_dtype=bf16).
    x = image_embeds.astype(jnp.bfloat16).astype(jnp.float32)
    wq = w.astype(jnp.bfloat16).astype(jnp.float32)
    y = jnp.dot(x, wq, precision=jax.lax.Precision.HIGHEST) + b
    y = y.reshape(-1, T, D)
    mean = jnp.mean(y, axis=-1, keepdims=True)
    var = jnp.mean((y - mean) ** 2, axis=-1, keepdims=True)
    return (y - mean) / jnp.sqrt(var + 1e-5) * gamma + beta


if __name__ == "__main__":
    # Small shapes consistent with the module: cross_attention_dim = D,
    # clip_embeddings_dim = E, clip_extra_context_tokens = T.
    B, E, D, T = 2, 256, 256, 4

    key = jax.random.PRNGKey(0)
    k_x, k_w, k_b, k_g, k_be = jax.random.split(key, 5)

    image_embeds = jax.random.normal(k_x, (B, E), dtype=jnp.float32)

    # Deterministic synthetic parameters (Linear + LayerNorm shapes from __init__).
    w = jax.random.normal(k_w, (E, T * D), dtype=jnp.float32) * (1.0 / E ** 0.5)
    b = jax.random.normal(k_b, (T * D,), dtype=jnp.float32) * 0.02
    gamma = 1.0 + 0.1 * jax.random.normal(k_g, (D,), dtype=jnp.float32)
    beta = 0.1 * jax.random.normal(k_be, (D,), dtype=jnp.float32)

    # One-time parameter prep (cast W to bf16 at load, not per call).
    params = prepare_image_proj_params(w, b, gamma, beta)
    ref = _reference(image_embeds, w, b, gamma, beta, T, D)

    # 1) f32 output, one token per grid step: the realistic large-model
    #    configuration (grid=(T,), double-buffered (E, D) weight slabs).
    out_f32 = image_proj_model(image_embeds, params, num_tokens=T, cross_dim=D,
                               out_dtype=jnp.float32, tokens_per_step=1)
    out_f32 = jax.block_until_ready(out_f32)
    assert out_f32.shape == (B, T, D)
    err32 = float(jnp.max(jnp.abs(out_f32 - ref)))
    assert err32 < 1e-3, f"f32 max abs error {err32}"

    # 2) Default config: bf16 output, auto token folding (what a bf16
    #    SD / IP-Adapter pipeline would use).
    out_bf16 = image_proj_model(image_embeds, params, num_tokens=T, cross_dim=D)
    out_bf16 = jax.block_until_ready(out_bf16)
    assert out_bf16.shape == (B, T, D)
    errbf = float(jnp.max(jnp.abs(out_bf16.astype(jnp.float32) - ref)))
    assert errbf < 5e-2, f"bf16 max abs error {errbf}"

    print("KERNEL_OK")
</pallas_src>

<mosaic_0001>
module attributes {stable_mosaic.version = 11 : i64} {
  func.func @image_proj_kernel(%arg0: i32, %arg1: memref<2x256xf32, #tpu.memory_space<vmem>>, %arg2: memref<256x256xbf16, #tpu.memory_space<vmem>>, %arg3: memref<1x256xf32, #tpu.memory_space<vmem>>, %arg4: memref<1x256xf32, #tpu.memory_space<vmem>>, %arg5: memref<1x256xf32, #tpu.memory_space<vmem>>, %arg6: memref<2x256xf32, #tpu.memory_space<vmem>>) attributes {dimension_semantics = [#tpu.dimension_semantics<parallel>], iteration_bounds = array<i64: 4>, scalar_prefetch = 0 : i64, scratch_operands = 0 : i64, tpu.core_type = #tpu.core_type<tc>, window_params = [{pipeline_mode = #tpu.pipeline_mode<synchronous>, transform_indices = @transform_0, window_bounds = array<i64: 2, 256>}, {transform_indices = @transform_1, window_bounds = array<i64: 256, 256>}, {transform_indices = @transform_2, window_bounds = array<i64: 1, 256>}, {pipeline_mode = #tpu.pipeline_mode<synchronous>, transform_indices = @transform_3, window_bounds = array<i64: 1, 256>}, {pipeline_mode = #tpu.pipeline_mode<synchronous>, transform_indices = @transform_4, window_bounds = array<i64: 1, 256>}, {transform_indices = @transform_5, window_bounds = array<i64: 2, 256>}]} {
    %c0 = arith.constant 0 : index
    %c0_0 = arith.constant 0 : index
    %0 = vector.load %arg1[%c0, %c0_0] : memref<2x256xf32, #tpu.memory_space<vmem>>, vector<2x256xf32>
    %1 = arith.truncf %0 : vector<2x256xf32> to vector<2x256xbf16>
    %c0_1 = arith.constant 0 : index
    %c0_2 = arith.constant 0 : index
    %2 = vector.load %arg2[%c0_1, %c0_2] : memref<256x256xbf16, #tpu.memory_space<vmem>>, vector<256x256xbf16>
    %cst = arith.constant dense<0.000000e+00> : vector<2x256xf32>
    %3 = tpu.matmul %1, %2, %cst {dimension_numbers = #tpu.dot_dimension_numbers<[1], [0], [0], [1], [0, 0, 1, 1], [], []>} : vector<2x256xbf16>, vector<256x256xbf16>, vector<2x256xf32> -> vector<2x256xf32>
    %c0_3 = arith.constant 0 : index
    %c0_4 = arith.constant 0 : index
    %4 = vector.load %arg3[%c0_3, %c0_4] : memref<1x256xf32, #tpu.memory_space<vmem>>, vector<1x256xf32>
    %5 = vector.broadcast %4 : vector<1x256xf32> to vector<2x256xf32>
    %6 = arith.addf %3, %5 : vector<2x256xf32>
    %c0_5 = arith.constant 0 : index
    %c0_6 = arith.constant 0 : index
    %7 = vector.load %arg4[%c0_5, %c0_6] : memref<1x256xf32, #tpu.memory_space<vmem>>, vector<1x256xf32>
    %c0_7 = arith.constant 0 : index
    %c0_8 = arith.constant 0 : index
    %8 = vector.load %arg5[%c0_7, %c0_8] : memref<1x256xf32, #tpu.memory_space<vmem>>, vector<1x256xf32>
    %cst_9 = arith.constant dense<0.000000e+00> : vector<2xf32>
    %9 = vector.multi_reduction <add>, %6, %cst_9 [1] : vector<2x256xf32> to vector<2xf32>
    %10 = vector.shape_cast %9 : vector<2xf32> to vector<2x1xf32>
    %cst_10 = arith.constant 2.560000e+02 : f32
    %11 = vector.broadcast %cst_10 : f32 to vector<2x1xf32>
    %12 = arith.divf %10, %11 : vector<2x1xf32>
    %13 = vector.broadcast %12 : vector<2x1xf32> to vector<2x256xf32>
    %14 = arith.subf %6, %13 : vector<2x256xf32>
    %15 = arith.mulf %14, %14 : vector<2x256xf32>
    %cst_11 = arith.constant dense<0.000000e+00> : vector<2xf32>
    %16 = vector.multi_reduction <add>, %15, %cst_11 [1] : vector<2x256xf32> to vector<2xf32>
    %17 = vector.shape_cast %16 : vector<2xf32> to vector<2x1xf32>
    %cst_12 = arith.constant 2.560000e+02 : f32
    %18 = vector.broadcast %cst_12 : f32 to vector<2x1xf32>
    %19 = arith.divf %17, %18 : vector<2x1xf32>
    %cst_13 = arith.constant 9.99999974E-6 : f32
    %20 = vector.broadcast %cst_13 : f32 to vector<2x1xf32>
    %21 = arith.addf %19, %20 : vector<2x1xf32>
    %22 = math.rsqrt %21 : vector<2x1xf32>
    %23 = vector.broadcast %22 : vector<2x1xf32> to vector<2x256xf32>
    %24 = arith.mulf %14, %23 : vector<2x256xf32>
    %25 = vector.broadcast %7 : vector<1x256xf32> to vector<2x256xf32>
    %26 = arith.mulf %24, %25 : vector<2x256xf32>
    %27 = vector.broadcast %8 : vector<1x256xf32> to vector<2x256xf32>
    %28 = arith.addf %26, %27 : vector<2x256xf32>
    %c0_14 = arith.constant 0 : index
    %c0_15 = arith.constant 0 : index
    %29 = vector.load %arg6[%c0_14, %c0_15] : memref<2x256xf32, #tpu.memory_space<vmem>>, vector<2x256xf32>
    tpu.vector_store %arg6[%c0_14, %c0_15], %28 {strides = array<i32>} : memref<2x256xf32, #tpu.memory_space<vmem>>, vector<2x256xf32>,
    return
  }
  func.func @transform_0(%arg0: i32) -> (i32, i32) {
    %c0_i32 = arith.constant 0 : i32
    %c0_i32_0 = arith.constant 0 : i32
    %c0_i32_1 = arith.constant 0 : i32
    return %c0_i32, %c0_i32_0 : i32, i32
  }
  func.func @transform_1(%arg0: i32) -> (i32, i32) {
    %c0_i32 = arith.constant 0 : i32
    %c0_i32_0 = arith.constant 0 : i32
    return %c0_i32, %arg0 : i32, i32
  }
  func.func @transform_2(%arg0: i32) -> (i32, i32) {
    %c0_i32 = arith.constant 0 : i32
    %c0_i32_0 = arith.constant 0 : i32
    return %c0_i32, %arg0 : i32, i32
  }
  func.func @transform_3(%arg0: i32) -> (i32, i32) {
    %c0_i32 = arith.constant 0 : i32
    %c0_i32_0 = arith.constant 0 : i32
    %c0_i32_1 = arith.constant 0 : i32
    return %c0_i32, %c0_i32_0 : i32, i32
  }
  func.func @transform_4(%arg0: i32) -> (i32, i32) {
    %c0_i32 = arith.constant 0 : i32
    %c0_i32_0 = arith.constant 0 : i32
    %c0_i32_1 = arith.constant 0 : i32
    return %c0_i32, %c0_i32_0 : i32, i32
  }
  func.func @transform_5(%arg0: i32) -> (i32, i32) {
    %c0_i32 = arith.constant 0 : i32
    %c0_i32_0 = arith.constant 0 : i32
    return %c0_i32, %arg0 : i32, i32
  }
}

</mosaic_0001>

<llo_original>
// kernel: tpu_custom_call.1
$region0: #{tpu_custom_call.1}
  #allocation0 [shape = 'u32[]', space=smem, size = 0x4, offset = 0x4, fixed_abs, tag = 'smem constant byte address 0x4 - core index']
  #allocation1 [shape = 'u32[72,128]{1,0:T(1,128)}', space=vmem, size = 0x9000, scoped, tag = 'internal scratch']
  %s0 = inlined_call_operand.hbm [shape: f32[2,256], index: 0, kind: input, shape index: {}]
  %s1 = inlined_call_operand.hbm [shape: bf16[256,1024], index: 1, kind: input, shape index: {}]
  %s2 = inlined_call_operand.hbm [shape: f32[1,1024], index: 2, kind: input, shape index: {}]
  %s3 = inlined_call_operand.vmem [shape: f32[1,256], index: 3, kind: input, shape index: {}]
  %s4 = inlined_call_operand.hbm [shape: f32[1,256], index: 4, kind: input, shape index: {}]
  %s5 = inlined_call_operand.hbm [shape: f32[2,1024], index: 5, kind: output, shape index: {}]
  %s6 = sld [smem:[#allocation0]]
  $region69: #{tpu_custom_call.1} parent=0
    _
  %s8 = ssub.s32 1, %s6
  %s9 = scalar_select 0, %s8, %s6
  $region1: #{tpu_custom_call.1} parent=0
    #allocation2 [shape = 'u8[2048]{0}', space=vmem, size = 0x800, scoped, tag = 'input window, operand 0, single buffered']
    #allocation3 [shape = 's32[2]{0}', space=sflag, size = 0x8, scoped, tag = 'scoped memory for tpu_custom_call.1']
    #allocation4 [shape = 's32[2]{0}', space=sflag, size = 0x8, scoped, tag = 'scoped memory for tpu_custom_call.1']
    #allocation5 [shape = 'u8[262144]{0}', space=vmem, size = 0x40000, scoped, tag = 'input window, operand 1']
    #allocation6 [shape = 's32[2]{0}', space=sflag, size = 0x8, scoped, tag = 'scoped memory for tpu_custom_call.1']
    #allocation7 [shape = 'u8[2048]{0}', space=vmem, size = 0x800, scoped, tag = 'input window, operand 2']
    #allocation8 [shape = 'u8[1024]{0}', space=vmem, size = 0x400, scoped, tag = 'input window, operand 4, single buffered']
    #allocation9 [shape = 's32[1]{0}', space=sflag, size = 0x4, scoped, tag = 'scoped memory for tpu_custom_call.1']
    #allocation10 [shape = 'u8[4096]{0}', space=vmem, size = 0x1000, scoped, tag = 'output window, operand 0']
    %10 = vsyncpa [#allocation3], 0
    %11 = vsyncpa [#allocation6], 0
    %s12 = scalar_lea.sflag [#allocation6], 1
    %13 = vsyncpa %s12, 0
    %14 = vsyncpa [#allocation9], 0
    %15 = vsyncpa [#allocation4], 0
    %s16 = scalar_lea.sflag [#allocation4], 1
    %17 = vsyncpa %s16, 0
    loop: start=0, step=1, limit=6
    $region2: #{tpu_custom_call.1} parent=1 // loop_pre_header
      _
    $region3: #{tpu_custom_call.1} parent=1 // loop_header
      %s19 = sphi 0, %s23
      %p20 = scmp.ge.s32.totalorder %s19, 6
      %s27 = sphi 0, %s27
      %s29 = sphi 0, %s27
      %s30 = sphi 0, %s29
      %s44 = sphi 0, %s30
      %s50 = sphi 0, %s52
      %s53 = sphi 0, %s50
      %s54 = sphi 0, %s53
      %s70 = sphi 0, %s54
      %s76 = sphi 0, %s78
      %s79 = sphi 0, %s76
      %s80 = sphi 0, %s79
      %s96 = sphi 0, %s80
      %s100 = sphi 0, %s100
      %s102 = sphi 0, %s100
      %s103 = sphi 0, %s102
      %s117 = sphi 0, %s103
      %s121 = sphi 0, %s121
      %s123 = sphi 0, %s121
      %s124 = sphi 0, %s123
      %s138 = sphi 0, %s124
      %s144 = sphi 0, %s146
      %s147 = sphi 0, %s144
      %s148 = sphi 0, %s147
      %s164 = sphi 0, %s148
    $region4: #{tpu_custom_call.1} parent=1 // loop_header_branch
      %22 = sbr.rel (%p20) target = $region8
    $region5: #{tpu_custom_call.1} parent=1 // loop_body
      %s24 = ssub.s32 %s19, 1
      %s25 = ssub.s32 %s19, 2
      %s26 = sadd.s32 %s19, 1
      %s28 = sadd.s32 %s27, 1
      %p31 = scmp.eq.s32.totalorder %s19, 3
      %p32 = scmp.ne.s32.totalorder %s27, %s29
      %p33 = scmp.eq.s32.totalorder %s19, 0
      %p34 = por %p32, %p33
      %p35 = scmp.ne.s32.totalorder %s27, %s29
      %p36 = scmp.eq.s32.totalorder %s24, 3
      %p37 = por %p35, %p36
      %p38 = scmp.ne.s32.totalorder %s29, %s30
      %p39 = scmp.eq.s32.totalorder %s24, 0
      %p40 = por %p38, %p39
      %p41 = scmp.ne.s32.totalorder %s29, %s30
      %p42 = scmp.eq.s32.totalorder %s25, 3
      %p43 = por %p41, %p42
      %p45 = scmp.ne.s32.totalorder %s30, %s44
      %p46 = scmp.eq.s32.totalorder %s25, 0
      %p47 = por %p45, %p46
      %s48 = ssub.s32 %s19, %s26
      %p49 = scmp.eq.s32.totalorder %s48, 0
      %s51 = sadd.s32 %s50, 1
      %s52 = scalar_select %p49, %s50, %s51
      %p55 = pneg %p49
      %p56 = scmp.eq.s32.totalorder %s19, 3
      %p57 = por %p55, %p56
      %p58 = scmp.ne.s32.totalorder %s50, %s53
      %p59 = scmp.eq.s32.totalorder %s19, 0
      %p60 = por %p58, %p59
      %p61 = scmp.ne.s32.totalorder %s50, %s53
      %p62 = scmp.eq.s32.totalorder %s24, 3
      %p63 = por %p61, %p62
      %p64 = scmp.ne.s32.totalorder %s53, %s54
      %p65 = scmp.eq.s32.totalorder %s24, 0
      %p66 = por %p64, %p65
      %p67 = scmp.ne.s32.totalorder %s53, %s54
      %p68 = scmp.eq.s32.totalorder %s25, 3
      %p69 = por %p67, %p68
      %p71 = scmp.ne.s32.totalorder %s54, %s70
      %p72 = scmp.eq.s32.totalorder %s25, 0
      %p73 = por %p71, %p72
      %s74 = ssub.s32 %s19, %s26
      %p75 = scmp.eq.s32.totalorder %s74, 0
      %s77 = sadd.s32 %s76, 1
      %s78 = scalar_select %p75, %s76, %s77
      %p81 = pneg %p75
      %p82 = scmp.eq.s32.totalorder %s19, 3
      %p83 = por %p81, %p82
      %p84 = scmp.ne.s32.totalorder %s76, %s79
      %p85 = scmp.eq.s32.totalorder %s19, 0
      %p86 = por %p84, %p85
      %p87 = scmp.ne.s32.totalorder %s76, %s79
      %p88 = scmp.eq.s32.totalorder %s24, 3
      %p89 = por %p87, %p88
      %p90 = scmp.ne.s32.totalorder %s79, %s80
      %p91 = scmp.eq.s32.totalorder %s24, 0
      %p92 = por %p90, %p91
      %p93 = scmp.ne.s32.totalorder %s79, %s80
      %p94 = scmp.eq.s32.totalorder %s25, 3
      %p95 = por %p93, %p94
      %p97 = scmp.ne.s32.totalorder %s80, %s96
      %p98 = scmp.eq.s32.totalorder %s25, 0
      %p99 = por %p97, %p98
      %s101 = sadd.s32 %s100, 1
      %p104 = scmp.eq.s32.totalorder %s19, 3
      %p105 = scmp.ne.s32.totalorder %s100, %s102
      %p106 = scmp.eq.s32.totalorder %s19, 0
      %p107 = por %p105, %p106
      %p108 = scmp.ne.s32.totalorder %s100, %s102
      %p109 = scmp.eq.s32.totalorder %s24, 3
      %p110 = por %p108, %p109
      %p111 = scmp.ne.s32.totalorder %s102, %s103
      %p112 = scmp.eq.s32.totalorder %s24, 0
      %p113 = por %p111, %p112
      %p114 = scmp.ne.s32.totalorder %s102, %s103
      %p115 = scmp.eq.s32.totalorder %s25, 3
      %p116 = por %p114, %p115
      %p118 = scmp.ne.s32.totalorder %s103, %s117
      %p119 = scmp.eq.s32.totalorder %s25, 0
      %p120 = por %p118, %p119
      %s122 = sadd.s32 %s121, 1
      %p125 = scmp.eq.s32.totalorder %s19, 3
      %p126 = scmp.ne.s32.totalorder %s121, %s123
      %p127 = scmp.eq.s32.totalorder %s19, 0
      %p128 = por %p126, %p127
      %p129 = scmp.ne.s32.totalorder %s121, %s123
      %p130 = scmp.eq.s32.totalorder %s24, 3
      %p131 = por %p129, %p130
      %p132 = scmp.ne.s32.totalorder %s123, %s124
      %p133 = scmp.eq.s32.totalorder %s24, 0
      %p134 = por %p132, %p133
      %p135 = scmp.ne.s32.totalorder %s123, %s124
      %p136 = scmp.eq.s32.totalorder %s25, 3
      %p137 = por %p135, %p136
      %p139 = scmp.ne.s32.totalorder %s124, %s138
      %p140 = scmp.eq.s32.totalorder %s25, 0
      %p141 = por %p139, %p140
      %s142 = ssub.s32 %s19, %s26
      %p143 = scmp.eq.s32.totalorder %s142, 0
      %s145 = sadd.s32 %s144, 1
      %s146 = scalar_select %p143, %s144, %s145
      %p149 = pneg %p143
      %p150 = scmp.eq.s32.totalorder %s19, 3
      %p151 = por %p149, %p150
      %p152 = scmp.ne.s32.totalorder %s144, %s147
      %p153 = scmp.eq.s32.totalorder %s19, 0
      %p154 = por %p152, %p153
      %p155 = scmp.ne.s32.totalorder %s144, %s147
      %p156 = scmp.eq.s32.totalorder %s24, 3
      %p157 = por %p155, %p156
      %p158 = scmp.ne.s32.totalorder %s147, %s148
      %p159 = scmp.eq.s32.totalorder %s24, 0
      %p160 = por %p158, %p159
      %p161 = scmp.ne.s32.totalorder %s147, %s148
      %p162 = scmp.eq.s32.totalorder %s25, 3
      %p163 = por %p161, %p162
      %p165 = scmp.ne.s32.totalorder %s148, %s164
      %p166 = scmp.eq.s32.totalorder %s25, 0
      %p167 = por %p165, %p166
      %p168 = scmp.le.s32.totalorder 1, %s19
      %p169 = scmp.lt.s32.totalorder %s19, 5
      %p170 = pnand %p168, %p169
      %p171 = pneg %p170
      // Predicated region
      $region9: #{tpu_custom_call.1} parent=5 // pred_check
        _
      $region10: #{tpu_custom_call.1} parent=5 // pred_check_branch
        %173 = sbr.rel (%p170) target = $region12
      $region11: #{tpu_custom_call.1} parent=5 // pred_region
        %s174 = ssub.s32 %s19, 1
        // Predicated region
        $region13: #{tpu_custom_call.1} parent=11 // pred_check
          %p175 = pneg %p40
        $region14: #{tpu_custom_call.1} parent=11 // pred_check_branch
          %177 = sbr.rel (%p175) target = $region16
        $region15: #{tpu_custom_call.1} parent=11 // pred_region
          %179 = vsyncadd [#allocation3], 0
          %s181 = sshll.u32 %s0, 4
          %s182 = int_to_ptr.hbm [resolvable:$true] %s181
          %s183 = sshll.u32 [#allocation2], 4
          %s184 = int_to_ptr.vmem [resolvable:$true] %s183
          %186 = dma.hbm_to_vmem [thread:$0]  %s182, 64, %s184, [#allocation3]
        $region16: #{tpu_custom_call.1} parent=11 // pred_fallthru
          _
        // Predicated region
        $region17: #{tpu_custom_call.1} parent=11 // pred_check
          %p187 = pneg %p113
        $region18: #{tpu_custom_call.1} parent=11 // pred_check_branch
          %189 = sbr.rel (%p187) target = $region20
        $region19: #{tpu_custom_call.1} parent=11 // pred_region
          _
        $region20: #{tpu_custom_call.1} parent=11 // pred_fallthru
          _
        // Predicated region
        $region21: #{tpu_custom_call.1} parent=11 // pred_check
          %p190 = pneg %p134
        $region22: #{tpu_custom_call.1} parent=11 // pred_check_branch
          %192 = sbr.rel (%p190) target = $region24
        $region23: #{tpu_custom_call.1} parent=11 // pred_region
          %194 = vsyncadd [#allocation9], 0
          %s196 = sshll.u32 %s4, 4
          %s197 = int_to_ptr.hbm [resolvable:$true] %s196
          %s198 = sshll.u32 [#allocation8], 4
          %s199 = int_to_ptr.vmem [resolvable:$true] %s198
          %201 = dma.hbm_to_vmem [thread:$0]  %s197, 32, %s199, [#allocation9]
        $region24: #{tpu_custom_call.1} parent=11 // pred_fallthru
          _
      $region12: #{tpu_custom_call.1} parent=5 // pred_fallthru
        _
      %p202 = scmp.lt.s32.totalorder %s19, 4
      // Predicated region
      $region25: #{tpu_custom_call.1} parent=5 // pred_check
        %p203 = pneg %p202
      $region26: #{tpu_custom_call.1} parent=5 // pred_check_branch
        %205 = sbr.rel (%p203) target = $region28
      $region27: #{tpu_custom_call.1} parent=5 // pred_region
        // Predicated region
        $region29: #{tpu_custom_call.1} parent=27 // pred_check
          %p206 = pneg %p60
        $region30: #{tpu_custom_call.1} parent=27 // pred_check_branch
          %208 = sbr.rel (%p206) target = $region32
        $region31: #{tpu_custom_call.1} parent=27 // pred_region
          %s209 = sand.u32 %s19, 1
          %s210 = scalar_lea.sflag [#allocation6], %s209
          %s211 = sand.u32 %s50, 1
          %s212 = smul.addr %s211, 256
          %s213 = scalar_lea.vmem [#allocation5], %s212
          %s214 = smul.u32 2, %s19
          %216 = vsyncadd %s210, 0
          %s217 = smul.addr %s214, 4
          %s218 = scalar_lea.hbm %s1, %s217
          %s219 = sshll.u32 %s218, 4
          %s220 = int_to_ptr.hbm [resolvable:$true] %s219
          %s221 = sshll.u32 %s213, 4
          %s222 = int_to_ptr.vmem [resolvable:$true] %s221
          %227 = dma.hbm_to_vmem [thread:$0]  %s220, 4096, %s222, %s210, 512, 128, 8
        $region32: #{tpu_custom_call.1} parent=27 // pred_fallthru
          _
        // Predicated region
        $region33: #{tpu_custom_call.1} parent=27 // pred_check
          %p228 = pneg %p86
        $region34: #{tpu_custom_call.1} parent=27 // pred_check_branch
          %230 = sbr.rel (%p228) target = $region36
        $region35: #{tpu_custom_call.1} parent=27 // pred_region
          %s231 = sand.u32 %s19, 1
          %s232 = scalar_lea.sflag [#allocation6], %s231
          %s233 = sand.u32 %s76, 1
          %s234 = smul.addr %s233, 2
          %s235 = scalar_lea.vmem [#allocation7], %s234
          %s236 = smul.u32 2, %s19
          %238 = vsyncadd %s232, 0
          %s239 = scalar_lea.hbm %s2, %s236
          %s241 = sshll.u32 %s239, 4
          %s242 = int_to_ptr.hbm [resolvable:$true] %s241
          %s243 = sshll.u32 %s235, 4
          %s244 = int_to_ptr.vmem [resolvable:$true] %s243
          %246 = dma.hbm_to_vmem [thread:$0]  %s242, 32, %s244, %s232
        $region36: #{tpu_custom_call.1} parent=27 // pred_fallthru
          _
      $region28: #{tpu_custom_call.1} parent=5 // pred_fallthru
        _
      %p247 = scmp.le.s32.totalorder 1, %s19
      %p248 = scmp.lt.s32.totalorder %s19, 5
      %p249 = pnand %p247, %p248
      %p250 = pneg %p249
      // Predicated region
      $region37: #{tpu_custom_call.1} parent=5 // pred_check
        _
      $region38: #{tpu_custom_call.1} parent=5 // pred_check_branch
        %252 = sbr.rel (%p249) target = $region40
      $region39: #{tpu_custom_call.1} parent=5 // pred_region
        %s253 = ssub.s32 %s19, 1
        // Predicated region
        $region41: #{tpu_custom_call.1} parent=39 // pred_check
          %p254 = pneg %p40
        $region42: #{tpu_custom_call.1} parent=39 // pred_check_branch
          %256 = sbr.rel (%p254) target = $region44
        $region43: #{tpu_custom_call.1} parent=39 // pred_region
          %258 = dma.done [#allocation3], 64
        $region44: #{tpu_custom_call.1} parent=39 // pred_fallthru
          _
        %s259 = sand.u32 %s24, 1
        %s260 = scalar_lea.sflag [#allocation6], %s259
        %s261 = sand.u32 %s53, 1
        %s262 = smul.addr %s261, 256
        %s263 = scalar_lea.vmem [#allocation5], %s262
        // Predicated region
        $region45: #{tpu_custom_call.1} parent=39 // pred_check
          %p264 = pneg %p66
        $region46: #{tpu_custom_call.1} parent=39 // pred_check_branch
          %266 = sbr.rel (%p264) target = $region48
        $region47: #{tpu_custom_call.1} parent=39 // pred_region
          %268 = dma.done %s260, 4096
        $region48: #{tpu_custom_call.1} parent=39 // pred_fallthru
          _
        %s269 = sand.u32 %s24, 1
        %s270 = scalar_lea.sflag [#allocation6], %s269
        %s271 = sand.u32 %s79, 1
        %s272 = smul.addr %s271, 2
        %s273 = scalar_lea.vmem [#allocation7], %s272
        // Predicated region
        $region49: #{tpu_custom_call.1} parent=39 // pred_check
          %p274 = pneg %p92
        $region50: #{tpu_custom_call.1} parent=39 // pred_check_branch
          %276 = sbr.rel (%p274) target = $region52
        $region51: #{tpu_custom_call.1} parent=39 // pred_region
          %278 = dma.done %s270, 32
        $region52: #{tpu_custom_call.1} parent=39 // pred_fallthru
          _
        // Predicated region
        $region53: #{tpu_custom_call.1} parent=39 // pred_check
          %p279 = pneg %p134
        $region54: #{tpu_custom_call.1} parent=39 // pred_check_branch
          %281 = sbr.rel (%p279) target = $region56
        $region55: #{tpu_custom_call.1} parent=39 // pred_region
          %283 = dma.done [#allocation9], 32
        $region56: #{tpu_custom_call.1} parent=39 // pred_fallthru
          _
        %p284 = pneg %p40
        %p285 = pneg %p37
        %s286 = sand.u32 %s24, 1
        %s287 = scalar_lea.sflag [#allocation6], %s286
        %s288 = sand.u32 %s53, 1
        %s289 = smul.addr %s288, 256
        %s290 = scalar_lea.vmem [#allocation5], %s289
        %p291 = pneg %p66
        %p292 = pneg %p63
        %s293 = sand.u32 %s24, 1
        %s294 = scalar_lea.sflag [#allocation6], %s293
        %s295 = sand.u32 %s79, 1
        %s296 = smul.addr %s295, 2
        %s297 = scalar_lea.vmem [#allocation7], %s296
        %p298 = pneg %p92
        %p299 = pneg %p89
        %p300 = pneg %p113
        %p301 = pneg %p110
        %p302 = pneg %p134
        %p303 = pneg %p131
        %p304 = pneg %p160
        %p305 = pneg %p157
        %s306 = sand.u32 %s147, 1
        %s307 = scalar_lea.sflag [#allocation4], %s306
        %s308 = sand.u32 %s147, 1
        %s309 = smul.addr %s308, 4
        %s310 = scalar_lea.vmem [#allocation10], %s309
        %s311 = smul.u32 2, %s24
        %s312 = smul.u32 2, %s24
        %s313 = smul.u32 2, %s24
        %v314 = vld [vmem:[#allocation2] sm:$0xf]
        %316 = vst [vmem:[#allocation1] ss:$4 sm:$0xff] %v314
        %v317 = vld.sshfl [vmem:[#allocation1] sm:$0xff pattern:$0x73625140]
        %v318 = vld.sshfl [vmem:[#allocation1 + $0x8] sm:$0xff pattern:$0x73625140]
        %v321 = vpack.c.bf16 %v317, %v317
        %v322 = vpack.c.bf16 %v318, %v318
        %v323 = vld [vmem:[%s263] sm:$0xff]
        %v324 = vld [vmem:[%s263 + $0x8] sm:$0xff]
        %v325 = vld [vmem:[%s263 + $0x10] sm:$0xff]
        %v326 = vld [vmem:[%s263 + $0x18] sm:$0xff]
        %v327 = vld [vmem:[%s263 + $0x20] sm:$0xff]
        %v328 = vld [vmem:[%s263 + $0x28] sm:$0xff]
        %v329 = vld [vmem:[%s263 + $0x30] sm:$0xff]
        %v330 = vld [vmem:[%s263 + $0x38] sm:$0xff]
        %v331 = vld [vmem:[%s263 + $0x40] sm:$0xff]
        %v332 = vld [vmem:[%s263 + $0x48] sm:$0xff]
        %v333 = vld [vmem:[%s263 + $0x50] sm:$0xff]
        %v334 = vld [vmem:[%s263 + $0x58] sm:$0xff]
        %v335 = vld [vmem:[%s263 + $0x60] sm:$0xff]
        %v336 = vld [vmem:[%s263 + $0x68] sm:$0xff]
        %v337 = vld [vmem:[%s263 + $0x70] sm:$0xff]
        %v338 = vld [vmem:[%s263 + $0x78] sm:$0xff]
        %v339 = vld [vmem:[%s263 + $0x80] sm:$0xff]
        %v340 = vld [vmem:[%s263 + $0x88] sm:$0xff]
        %v341 = vld [vmem:[%s263 + $0x90] sm:$0xff]
        %v342 = vld [vmem:[%s263 + $0x98] sm:$0xff]
        %v343 = vld [vmem:[%s263 + $0xa0] sm:$0xff]
        %v344 = vld [vmem:[%s263 + $0xa8] sm:$0xff]
        %v345 = vld [vmem:[%s263 + $0xb0] sm:$0xff]
        %v346 = vld [vmem:[%s263 + $0xb8] sm:$0xff]
        %v347 = vld [vmem:[%s263 + $0xc0] sm:$0xff]
        %v348 = vld [vmem:[%s263 + $0xc8] sm:$0xff]
        %v349 = vld [vmem:[%s263 + $0xd0] sm:$0xff]
        %v350 = vld [vmem:[%s263 + $0xd8] sm:$0xff]
        %v351 = vld [vmem:[%s263 + $0xe0] sm:$0xff]
        %v352 = vld [vmem:[%s263 + $0xe8] sm:$0xff]
        %v353 = vld [vmem:[%s263 + $0xf0] sm:$0xff]
        %v354 = vld [vmem:[%s263 + $0xf8] sm:$0xff]
        %v355 = vld [vmem:[%s273] sm:$0x3]
        %v357 = vperm.slane %v355, 0
        %v358 = vperm.slane %v355, 1
        %v393 = vunpack.c.l.b16 %v323
        %v394 = vunpack.c.h.b16 %v323
        %v395 = vunpack.c.l.b16 %v324
        %v396 = vunpack.c.h.b16 %v324
        %v397 = vunpack.c.l.b16 %v325
        %v398 = vunpack.c.h.b16 %v325
        %v399 = vunpack.c.l.b16 %v326
        %v400 = vunpack.c.h.b16 %v326
        %v401 = vunpack.c.l.b16 %v327
        %v402 = vunpack.c.h.b16 %v327
        %v403 = vunpack.c.l.b16 %v328
        %v404 = vunpack.c.h.b16 %v328
        %v405 = vunpack.c.l.b16 %v329
        %v406 = vunpack.c.h.b16 %v329
        %v407 = vunpack.c.l.b16 %v330
        %v408 = vunpack.c.h.b16 %v330
        %v409 = vunpack.c.l.b16 %v331
        %v410 = vunpack.c.h.b16 %v331
        %v411 = vunpack.c.l.b16 %v332
        %v412 = vunpack.c.h.b16 %v332
        %v413 = vunpack.c.l.b16 %v333
        %v414 = vunpack.c.h.b16 %v333
        %v415 = vunpack.c.l.b16 %v334
        %v416 = vunpack.c.h.b16 %v334
        %v417 = vunpack.c.l.b16 %v335
        %v418 = vunpack.c.h.b16 %v335
        %v419 = vunpack.c.l.b16 %v336
        %v420 = vunpack.c.h.b16 %v336
        %v421 = vunpack.c.l.b16 %v337
        %v422 = vunpack.c.h.b16 %v337
        %v423 = vunpack.c.l.b16 %v338
        %v424 = vunpack.c.h.b16 %v338
        %v425 = vunpack.c.l.b16 %v339
        %v426 = vunpack.c.h.b16 %v339
        %v427 = vunpack.c.l.b16 %v340
        %v428 = vunpack.c.h.b16 %v340
        %v429 = vunpack.c.l.b16 %v341
        %v430 = vunpack.c.h.b16 %v341
        %v431 = vunpack.c.l.b16 %v342
        %v432 = vunpack.c.h.b16 %v342
        %v433 = vunpack.c.l.b16 %v343
        %v434 = vunpack.c.h.b16 %v343
        %v435 = vunpack.c.l.b16 %v344
        %v436 = vunpack.c.h.b16 %v344
        %v437 = vunpack.c.l.b16 %v345
        %v438 = vunpack.c.h.b16 %v345
        %v439 = vunpack.c.l.b16 %v346
        %v440 = vunpack.c.h.b16 %v346
        %v441 = vunpack.c.l.b16 %v347
        %v442 = vunpack.c.h.b16 %v347
        %v443 = vunpack.c.l.b16 %v348
        %v444 = vunpack.c.h.b16 %v348
        %v445 = vunpack.c.l.b16 %v349
        %v446 = vunpack.c.h.b16 %v349
        %v447 = vunpack.c.l.b16 %v350
        %v448 = vunpack.c.h.b16 %v350
        %v449 = vunpack.c.l.b16 %v351
        %v450 = vunpack.c.h.b16 %v351
        %v451 = vunpack.c.l.b16 %v352
        %v452 = vunpack.c.h.b16 %v352
        %v453 = vunpack.c.l.b16 %v353
        %v454 = vunpack.c.h.b16 %v353
        %v455 = vunpack.c.l.b16 %v354
        %v456 = vunpack.c.h.b16 %v354
        %v457 = vpack.c.b16 %v395, %v393
        %v458 = vpack.c.b16 %v396, %v394
        %v459 = vpack.c.b16 %v399, %v397
        %v460 = vpack.c.b16 %v400, %v398
        %v461 = vpack.c.b16 %v403, %v401
        %v462 = vpack.c.b16 %v404, %v402
        %v463 = vpack.c.b16 %v407, %v405
        %v464 = vpack.c.b16 %v408, %v406
        %v465 = vpack.c.b16 %v411, %v409
        %v466 = vpack.c.b16 %v412, %v410
        %v467 = vpack.c.b16 %v415, %v413
        %v468 = vpack.c.b16 %v416, %v414
        %v469 = vpack.c.b16 %v419, %v417
        %v470 = vpack.c.b16 %v420, %v418
        %v471 = vpack.c.b16 %v423, %v421
        %v472 = vpack.c.b16 %v424, %v422
        %v473 = vpack.c.b16 %v427, %v425
        %v474 = vpack.c.b16 %v428, %v426
        %v475 = vpack.c.b16 %v431, %v429
        %v476 = vpack.c.b16 %v432, %v430
        %v477 = vpack.c.b16 %v435, %v433
        %v478 = vpack.c.b16 %v436, %v434
        %v479 = vpack.c.b16 %v439, %v437
        %v480 = vpack.c.b16 %v440, %v438
        %v481 = vpack.c.b16 %v443, %v441
        %v482 = vpack.c.b16 %v444, %v442
        %v483 = vpack.c.b16 %v447, %v445
        %v484 = vpack.c.b16 %v448, %v446
        %v485 = vpack.c.b16 %v451, %v449
        %v486 = vpack.c.b16 %v452, %v450
        %v487 = vpack.c.b16 %v455, %v453
        %v488 = vpack.c.b16 %v456, %v454
        %521 = vmatpush.bf16.msra.mxu0 %v471
        %522 = vmatpush.bf16.msra.mxu0 %v469
        %523 = vmatpush.bf16.msra.mxu0 %v467
        %524 = vmatpush.bf16.msra.mxu0 %v465
        %525 = vmatpush.bf16.msra.mxu0 %v463
        %526 = vmatpush.bf16.msra.mxu0 %v461
        %527 = vmatpush.bf16.msra.mxu0 %v459
        %528 = vmatpush.bf16.msra.mxu0 %v457
        %529 = vmatmul.bf16.gmra.mxu0 %v321
        %v530 = vpop.f32.mrf.mxu0
        %v531 = vadd.f32 %v357, %v530
        %v532 = vpop.f32.mrf.mxu0
        %533 = vdwg.mxu0
        %534 = vmatpush.bf16.msra.mxu0 %v487
        %535 = vmatpush.bf16.msra.mxu0 %v485
        %536 = vmatpush.bf16.msra.mxu0 %v483
        %537 = vmatpush.bf16.msra.mxu0 %v481
        %538 = vmatpush.bf16.msra.mxu0 %v479
        %539 = vmatpush.bf16.msra.mxu0 %v477
        %540 = vmatpush.bf16.msra.mxu0 %v475
        %541 = vmatpush.bf16.msra.mxu0 %v473
        %542 = vmatmul.bf16.gmra.mxu0 %v322
        %v543 = vpop.f32.mrf.mxu0
        %v544 = vadd.f32 %v531, %v543
        %v545 = vpop.f32.mrf.mxu0
        %546 = vdwg.mxu0
        %547 = vmatpush.bf16.msra.mxu0 %v472
        %548 = vmatpush.bf16.msra.mxu0 %v470
        %549 = vmatpush.bf16.msra.mxu0 %v468
        %550 = vmatpush.bf16.msra.mxu0 %v466
        %551 = vmatpush.bf16.msra.mxu0 %v464
        %552 = vmatpush.bf16.msra.mxu0 %v462
        %553 = vmatpush.bf16.msra.mxu0 %v460
        %554 = vmatpush.bf16.msra.mxu0 %v458
        %555 = vmatmul.bf16.gmra.mxu0 %v321
        %v556 = vpop.f32.mrf.mxu0
        %v557 = vadd.f32 %v358, %v556
        %v558 = vpop.f32.mrf.mxu0
        %559 = vdwg.mxu0
        %560 = vmatpush.bf16.msra.mxu0 %v488
        %561 = vmatpush.bf16.msra.mxu0 %v486
        %562 = vmatpush.bf16.msra.mxu0 %v484
        %563 = vmatpush.bf16.msra.mxu0 %v482
        %564 = vmatpush.bf16.msra.mxu0 %v480
        %565 = vmatpush.bf16.msra.mxu0 %v478
        %566 = vmatpush.bf16.msra.mxu0 %v476
        %567 = vmatpush.bf16.msra.mxu0 %v474
        %568 = vmatmul.bf16.gmra.mxu0 %v322
        %v569 = vpop.f32.mrf.mxu0
        %v570 = vadd.f32 %v557, %v569
        %v571 = vpop.f32.mrf.mxu0
        %572 = vdwg.mxu0
        %v573 = vld [vmem:[%s3] sm:$0x3]
        %v574 = vld [vmem:[#allocation8] sm:$0x3]
        %vm575 = vcmask 1041408
        %v576 = vsel %vm575, %v544, 0.0
        %v577 = vsel %vm575, %v570, 0.0
        %v578 = vadd.f32 %v576, %v577
        %579 = vadd.xlane.f32.xlu0 %v578
        %v580 = vpop.xlane.xlu0 %579
        %v581 = vrcp.pop 256.0
        %v582 = vmul.f32 256.0, %v581
        %v583 = vsub.f32 1.0, %v582
        %v584 = vmul.f32 %v581, %v583
        %v585 = vadd.f32 %v581, %v584
        %vm586 = vweird.f32 %v581
        %v587 = vsel %vm586, %v581, %v585
        %v588 = vmul.f32 %v580, %v587
        %v589 = vsub.f32 %v544, %v588
        %v590 = vsub.f32 %v570, %v588
        %v591 = vmul.f32 %v589, %v589
        %v592 = vmul.f32 %v590, %v590
        %v593 = vsel %vm575, %v591, 0.0
        %v594 = vsel %vm575, %v592, 0.0
        %v595 = vadd.f32 %v593, %v594
        %596 = vadd.xlane.f32.xlu0 %v595
        %v597 = vpop.xlane.xlu0 %596
        %v598 = vmul.f32 %v597, %v587
        %v599 = vadd.f32 %v598, 1e-05
        %v600 = vrsqrt.pop %v599
        %v601 = vmul.f32 %v600, %v599
        %v602 = vmul.f32 %v601, %v600
        %v603 = vmul.f32 0.5, %v602
        %v604 = vsub.f32 1.5, %v603
        %v605 = vmul.f32 %v600, %v604
        %vm606 = vweird.f32 %v599
        %vm607 = vweird.f32 %v600
        %vm608 = vmor %vm606, %vm607
        %v609 = vsel %vm608, %v600, %v605
        %v610 = vmul.f32 %v589, %v609
        %v611 = vmul.f32 %v590, %v609
        %v613 = vperm.slane %v573, 0
        %v614 = vperm.slane %v573, 1
        %v617 = vmul.f32 %v610, %v613
        %v618 = vmul.f32 %v611, %v614
        %v620 = vperm.slane %v574, 0
        %v621 = vperm.slane %v574, 1
        %v624 = vadd.f32 %v617, %v620
        %v625 = vadd.f32 %v618, %v621
        %v628 = vrot.slane %v625, 6
        %v629 = vsel %vm575, %v624, %v628
        %631 = vst [vmem:[%s310] sm:$0xf] %v629
        %s632 = sand.u32 %s147, 1
        %s633 = scalar_lea.sflag [#allocation4], %s632
        %s634 = sand.u32 %s147, 1
        %s635 = smul.addr %s634, 4
        %s636 = scalar_lea.vmem [#allocation10], %s635
        // Predicated region
        $region57: #{tpu_custom_call.1} parent=39 // pred_check
          %p637 = pneg %p157
        $region58: #{tpu_custom_call.1} parent=39 // pred_check_branch
          %639 = sbr.rel (%p637) target = $region60
        $region59: #{tpu_custom_call.1} parent=39 // pred_region
          %s640 = smul.u32 2, %s24
          %642 = vsyncadd %s633, 0
          %s643 = smul.addr %s640, 2
          %s644 = scalar_lea.hbm %s5, %s643
          %s646 = sshll.u32 %s636, 4
          %s647 = int_to_ptr.vmem [resolvable:$true] %s646
          %s648 = sshll.u32 %s644, 4
          %s649 = int_to_ptr.hbm [resolvable:$true] %s648
          %651 = dma.vmem_to_hbm [thread:$0]  %s647, 64, %s649, %s633
        $region60: #{tpu_custom_call.1} parent=39 // pred_fallthru
          _
      $region40: #{tpu_custom_call.1} parent=5 // pred_fallthru
        _
      %p652 = scmp.le.s32.totalorder 2, %s19
      // Predicated region
      $region61: #{tpu_custom_call.1} parent=5 // pred_check
        %p653 = pneg %p652
      $region62: #{tpu_custom_call.1} parent=5 // pred_check_branch
        %655 = sbr.rel (%p653) target = $region64
      $region63: #{tpu_custom_call.1} parent=5 // pred_region
        %s656 = ssub.s32 %s19, 2
        // Predicated region
        $region65: #{tpu_custom_call.1} parent=63 // pred_check
          %p657 = pneg %p163
        $region66: #{tpu_custom_call.1} parent=63 // pred_check_branch
          %659 = sbr.rel (%p657) target = $region68
        $region67: #{tpu_custom_call.1} parent=63 // pred_region
          %s660 = sand.u32 %s148, 1
          %s661 = scalar_lea.sflag [#allocation4], %s660
          %s662 = sand.u32 %s148, 1
          %s663 = smul.addr %s662, 4
          %s664 = scalar_lea.vmem [#allocation10], %s663
          %666 = dma.done %s661, 64
        $region68: #{tpu_custom_call.1} parent=63 // pred_fallthru
          _
      $region64: #{tpu_custom_call.1} parent=5 // pred_fallthru
        _
    $region6: #{tpu_custom_call.1} parent=1 // loop_footer
      %s23 = sadd.s32 1, %s19
    $region7: #{tpu_custom_call.1} parent=1 // loop_footer_branch
      %18 = sbr.rel target = $region3
    $region8: #{tpu_custom_call.1} parent=1 // loop_exit
      _
    %667 = vsyncpa [#allocation3], 1
    %s668 = scalar_lea.sflag [#allocation3], 1
    %669 = vsyncpa %s668, 1
    %670 = vsyncpa [#allocation6], 1
    %s671 = scalar_lea.sflag [#allocation6], 1
    %672 = vsyncpa %s671, 1
    %673 = vsyncpa [#allocation9], 1
    %674 = vsyncpa [#allocation4], 1
    %s675 = scalar_lea.sflag [#allocation4], 1
    %676 = vsyncpa %s675, 1

</llo_original>
